<compile_context>
chip_gen: v5e
topology: v5e:2x2
jax: 0.10.0
libtpu: 0.0.40
codegen_flags: <defaults>
</compile_context>

<pallas_src>
import functools
import math

import jax
import jax.numpy as jnp
from jax.experimental import pallas as pl
from jax.experimental.pallas import tpu as pltpu


def _fc_ind_all_kernel(negslope, x_ref, w_ref, b_ref, o_ref):
    # x_ref: VMEM (window, TN, nfeatures)  node_emb tile (free (window, nodes, nf) view)
    # w_ref: VMEM (window, TN, nfeatures)  pre-transposed weight tile
    # b_ref: VMEM (1, TN)
    # o_ref: VMEM (1, TN) float32
    x = x_ref[...].astype(jnp.float32)   # no-op for f32 inputs
    w = w_ref[...].astype(jnp.float32)
    # Elementwise multiply (VPU); reduce the window axis (cross-vreg adds, VPU)
    # then the nfeatures lane axis (XLU).  No MXU: a width-1 dot would waste a
    # whole MXU pass plus result-FIFO pop latency.
    s = jnp.sum(x * w, axis=0)           # (TN, nfeatures)
    y = jnp.sum(s, axis=-1)              # (TN,)
    y = y + b_ref[0, :]
    y = jnp.where(y >= 0.0, y, negslope * y)   # leaky_relu
    o_ref[...] = y.reshape(o_ref.shape).astype(o_ref.dtype)


def _pick_node_tile(nodes, window, nfeatures, itemsize, budget_bytes=8 << 20):
    """Largest legal node tile whose double-buffered footprint fits the budget."""
    per_node = 2 * 2 * window * nfeatures * itemsize   # 2 inputs x 2 pipeline buffers
    max_tn = max(1, budget_bytes // per_node)
    if nodes <= max_tn:
        return nodes                                   # full dim -> always a legal block
    # Multiples of 128 keep the (1, TN) output/bias blocks full-lane and the
    # (window, TN, nf) input blocks sublane-aligned.
    t = (max_tn // 128) * 128
    while t >= 128:
        if nodes % t == 0:
            return t
        t -= 128
    return nodes                                       # fallback: single whole-dim block


def fc_ind_prepare_params(W, b, *, nodes, window, nfeatures):
    """One-time parameter relayout: W (nodes, window*nf) -> (window, nodes, nf).

    Amortized over all forwards (W is a static parameter), so both tensors share the
    same free view of node_emb and the kernel needs no gather at all.
    """
    W3 = jnp.asarray(W).reshape(nodes, window, nfeatures).transpose(1, 0, 2)
    W3 = jnp.asarray(W3)                               # materialize the relayout once
    b2 = jnp.asarray(b, jnp.float32).reshape(1, nodes)
    return W3, b2


def fc_ind_forward_all(node_emb, W3, b2, *, nodes, window, nfeatures, negslope,
                       node_tile=None):
    """Outputs for ALL nodes in one pallas_call: shape (nodes,) float32."""
    x3 = node_emb.reshape(window, nodes, nfeatures)    # free row-major view, no transpose
    itemsize = jnp.dtype(node_emb.dtype).itemsize
    tn = node_tile if node_tile is not None else _pick_node_tile(
        nodes, window, nfeatures, itemsize)
    assert nodes % tn == 0, (nodes, tn)
    grid = (nodes // tn,)

    block_in_bytes = window * tn * nfeatures * itemsize
    vmem_limit = int(min(64 << 20, max(16 << 20, 8 * block_in_bytes)))

    kernel = functools.partial(_fc_ind_all_kernel, float(negslope))
    out = pl.pallas_call(
        kernel,
        out_shape=jax.ShapeDtypeStruct((1, nodes), jnp.float32),
        grid_spec=pltpu.PrefetchScalarGridSpec(
            num_scalar_prefetch=0,
            grid=grid,
            in_specs=[
                pl.BlockSpec((window, tn, nfeatures), lambda i: (0, i, 0)),
                pl.BlockSpec((window, tn, nfeatures), lambda i: (0, i, 0)),
                pl.BlockSpec((1, tn), lambda i: (0, i)),
            ],
            out_specs=pl.BlockSpec((1, tn), lambda i: (0, i)),
        ),
        compiler_params=pltpu.CompilerParams(
            # Node tiles are independent: shards across the 2 TCs on v7x, no-op on v5e/v6e.
            dimension_semantics=("parallel",),
            vmem_limit_bytes=vmem_limit,
        ),
    )(x3, W3, b2)
    return out.reshape(nodes)


def fc_ind_forward_batch(node_emb, W3, b2, ids, *, nodes, window, nfeatures, negslope,
                         node_tile=None):
    """FC_IND outputs for a batch of node IDs: shape (num_ids,) float32."""
    all_out = fc_ind_forward_all(node_emb, W3, b2, nodes=nodes, window=window,
                                 nfeatures=nfeatures, negslope=negslope,
                                 node_tile=node_tile)
    ids = jnp.clip(jnp.asarray(ids, jnp.int32), 0, nodes - 1)   # guard OOB IDs
    return all_out[ids]


def fc_ind_forward(node_emb, W3, b2, ID, *, nodes, window, nfeatures, negslope):
    """Single-ID forward matching FC_IND.forward(node_emb, ID) -> shape (1,)."""
    ids = jnp.asarray([ID], dtype=jnp.int32)
    out = fc_ind_forward_batch(node_emb, W3, b2, ids, nodes=nodes, window=window,
                               nfeatures=nfeatures, negslope=negslope)
    return out.reshape(1)


def fc_ind_reference(node_emb, W, b, ID, *, nodes, window, nfeatures, negslope):
    rows = [node_emb[t * nodes + ID] for t in range(window)]
    x = jnp.concatenate(rows, axis=0)                  # (window*nfeatures,)
    y = jnp.dot(x, W[ID]) + b[ID]
    return jnp.where(y >= 0.0, y, negslope * y).reshape(1)


def _make_params(key, nodes, window, nfeatures):
    k_w, k_b = jax.random.split(key)
    fan_in = window * nfeatures
    # kaiming_normal_ (fan_in, leaky_relu gain) per-node Linear weight
    W = jax.random.normal(k_w, (nodes, fan_in), dtype=jnp.float32) * math.sqrt(2.0 / fan_in)
    # default nn.Linear bias init: U(-1/sqrt(fan_in), 1/sqrt(fan_in))
    bound = 1.0 / math.sqrt(fan_in)
    b = jax.random.uniform(k_b, (nodes,), dtype=jnp.float32, minval=-bound, maxval=bound)
    return W, b


def _run_case(key, nodes, window, nfeatures, negslope, node_tile=None):
    k_emb, k_p = jax.random.split(key)
    W, b = _make_params(k_p, nodes, window, nfeatures)
    node_emb = jax.random.normal(k_emb, (nodes * window, nfeatures), dtype=jnp.float32)
    W3, b2 = fc_ind_prepare_params(W, b, nodes=nodes, window=window, nfeatures=nfeatures)

    # Single-ID forward (matches the PyTorch module's forward signature).
    ID = nodes // 2
    out = jax.block_until_ready(
        fc_ind_forward(node_emb, W3, b2, ID, nodes=nodes, window=window,
                       nfeatures=nfeatures, negslope=negslope))
    ref = fc_ind_reference(node_emb, W, b, ID, nodes=nodes, window=window,
                           nfeatures=nfeatures, negslope=negslope)
    assert out.shape == (1,)
    assert jnp.allclose(out, ref, atol=1e-5, rtol=1e-5), (out, ref)

    # All-nodes batch in one pallas_call.
    out_all = jax.block_until_ready(
        fc_ind_forward_all(node_emb, W3, b2, nodes=nodes, window=window,
                           nfeatures=nfeatures, negslope=negslope, node_tile=node_tile))
    ref_all = jnp.concatenate([
        fc_ind_reference(node_emb, W, b, i, nodes=nodes, window=window,
                         nfeatures=nfeatures, negslope=negslope)
        for i in range(nodes)
    ])
    assert out_all.shape == (nodes,)
    assert jnp.allclose(out_all, ref_all, atol=1e-5, rtol=1e-5), (out_all, ref_all)


if __name__ == "__main__":
    key = jax.random.PRNGKey(0)
    k0, k1 = jax.random.split(key)

    # Small config matching the module's intended shapes (single grid step).
    _run_case(k0, nodes=4, window=8, nfeatures=32, negslope=0.2)

    # Larger config forcing the tiled multi-step path (grid=(2,), TN=128).
    _run_case(k1, nodes=256, window=4, nfeatures=32, negslope=0.2, node_tile=128)

    print("KERNEL_OK")
</pallas_src>

<mosaic_0001>
module attributes {stable_mosaic.version = 11 : i64} {
  func.func @_fc_ind_all_kernel(%arg0: i32, %arg1: memref<8x4x32xf32, #tpu.memory_space<vmem>>, %arg2: memref<8x4x32xf32, #tpu.memory_space<vmem>>, %arg3: memref<1x4xf32, #tpu.memory_space<vmem>>, %arg4: memref<1x4xf32, #tpu.memory_space<vmem>>) attributes {dimension_semantics = [#tpu.dimension_semantics<parallel>], iteration_bounds = array<i64: 1>, scalar_prefetch = 0 : i64, scratch_operands = 0 : i64, tpu.core_type = #tpu.core_type<tc>, window_params = [{transform_indices = @transform_0, window_bounds = array<i64: 8, 4, 32>}, {transform_indices = @transform_1, window_bounds = array<i64: 8, 4, 32>}, {transform_indices = @transform_2, window_bounds = array<i64: 1, 4>}, {transform_indices = @transform_3, window_bounds = array<i64: 1, 4>}]} {
    %c0 = arith.constant 0 : index
    %c0_0 = arith.constant 0 : index
    %c0_1 = arith.constant 0 : index
    %0 = vector.load %arg1[%c0, %c0_0, %c0_1] : memref<8x4x32xf32, #tpu.memory_space<vmem>>, vector<8x4x32xf32>
    %c0_2 = arith.constant 0 : index
    %c0_3 = arith.constant 0 : index
    %c0_4 = arith.constant 0 : index
    %1 = vector.load %arg2[%c0_2, %c0_3, %c0_4] : memref<8x4x32xf32, #tpu.memory_space<vmem>>, vector<8x4x32xf32>
    %2 = arith.mulf %0, %1 : vector<8x4x32xf32>
    %cst = arith.constant dense<0.000000e+00> : vector<4x32xf32>
    %3 = vector.multi_reduction <add>, %2, %cst [0] : vector<8x4x32xf32> to vector<4x32xf32>
    %cst_5 = arith.constant dense<0.000000e+00> : vector<4xf32>
    %4 = vector.multi_reduction <add>, %3, %cst_5 [1] : vector<4x32xf32> to vector<4xf32>
    %c0_6 = arith.constant 0 : index
    %c0_7 = arith.constant 0 : index
    %5 = vector.load %arg3[%c0_6, %c0_7] : memref<1x4xf32, #tpu.memory_space<vmem>>, vector<1x4xf32>
    %6 = vector.shape_cast %5 : vector<1x4xf32> to vector<4xf32>
    %7 = arith.addf %4, %6 : vector<4xf32>
    %cst_8 = arith.constant 0.000000e+00 : f32
    %8 = vector.broadcast %cst_8 : f32 to vector<4xf32>
    %9 = arith.cmpf oge, %7, %8 : vector<4xf32>
    %cst_9 = arith.constant 2.000000e-01 : f32
    %10 = vector.broadcast %cst_9 : f32 to vector<4xf32>
    %11 = arith.mulf %10, %7 : vector<4xf32>
    %12 = arith.select %9, %7, %11 : vector<4xi1>, vector<4xf32>
    %13 = vector.shape_cast %12 : vector<4xf32> to vector<1x4xf32>
    %c0_10 = arith.constant 0 : index
    %c0_11 = arith.constant 0 : index
    %14 = vector.load %arg4[%c0_10, %c0_11] : memref<1x4xf32, #tpu.memory_space<vmem>>, vector<1x4xf32>
    tpu.vector_store %arg4[%c0_10, %c0_11], %13 {strides = array<i32>} : memref<1x4xf32, #tpu.memory_space<vmem>>, vector<1x4xf32>,
    return
  }
  func.func @transform_0(%arg0: i32) -> (i32, i32, i32) {
    %c0_i32 = arith.constant 0 : i32
    %c0_i32_0 = arith.constant 0 : i32
    %c0_i32_1 = arith.constant 0 : i32
    return %c0_i32, %arg0, %c0_i32_0 : i32, i32, i32
  }
  func.func @transform_1(%arg0: i32) -> (i32, i32, i32) {
    %c0_i32 = arith.constant 0 : i32
    %c0_i32_0 = arith.constant 0 : i32
    %c0_i32_1 = arith.constant 0 : i32
    return %c0_i32, %arg0, %c0_i32_0 : i32, i32, i32
  }
  func.func @transform_2(%arg0: i32) -> (i32, i32) {
    %c0_i32 = arith.constant 0 : i32
    %c0_i32_0 = arith.constant 0 : i32
    return %c0_i32, %arg0 : i32, i32
  }
  func.func @transform_3(%arg0: i32) -> (i32, i32) {
    %c0_i32 = arith.constant 0 : i32
    %c0_i32_0 = arith.constant 0 : i32
    return %c0_i32, %arg0 : i32, i32
  }
}

</mosaic_0001>

<llo_original>
// kernel: tpu_custom_call.1
$region0: #{tpu_custom_call.1}
  #allocation0 [shape = 'u32[]', space=smem, size = 0x4, offset = 0x4, fixed_abs, tag = 'smem constant byte address 0x4 - core index']
  #allocation1 [shape = 'u32[72,128]{1,0:T(1,128)}', space=vmem, size = 0x9000, scoped, tag = 'internal scratch']
  %s0 = inlined_call_operand.hbm [shape: f32[8,4,32], index: 0, kind: input, shape index: {}]
  %s1 = inlined_call_operand.hbm [shape: f32[8,4,32], index: 1, kind: input, shape index: {}]
  %s2 = inlined_call_operand.vmem [shape: f32[1,4], index: 2, kind: input, shape index: {}]
  %s3 = inlined_call_operand.hbm [shape: f32[1,4], index: 3, kind: output, shape index: {}]
  %s4 = sld [smem:[#allocation0]]
  $region30: #{tpu_custom_call.1} parent=0
    _
  %s6 = ssub.s32 1, %s4
  %s7 = scalar_select 0, %s6, %s4
  $region1: #{tpu_custom_call.1} parent=0
    #allocation2 [shape = 'u8[16384]{0}', space=vmem, size = 0x4000, scoped, tag = 'input window, operand 0, single buffered']
    #allocation3 [shape = 's32[1]{0}', space=sflag, size = 0x4, scoped, tag = 'scoped memory for tpu_custom_call.1']
    #allocation4 [shape = 's32[1]{0}', space=sflag, size = 0x4, scoped, tag = 'scoped memory for tpu_custom_call.1']
    #allocation5 [shape = 'u8[16384]{0}', space=vmem, size = 0x4000, scoped, tag = 'input window, operand 1, single buffered']
    #allocation6 [shape = 's32[1]{0}', space=sflag, size = 0x4, scoped, tag = 'scoped memory for tpu_custom_call.1']
    #allocation7 [shape = 'u8[512]{0}', space=vmem, size = 0x400, scoped, tag = 'output window, operand 0, single buffered']
    %8 = vsyncpa [#allocation3], 0
    %9 = vsyncpa [#allocation6], 0
    %10 = vsyncpa [#allocation4], 0
    // Predicated region
    $region2: #{tpu_custom_call.1} parent=1 // pred_check
      _
    $region3: #{tpu_custom_call.1} parent=1 // pred_check_branch
      %12 = sbr.rel (0) target = $region5
    $region4: #{tpu_custom_call.1} parent=1 // pred_region
      %14 = vsyncadd [#allocation3], 0
      %s15 = sshll.u32 %s0, 4
      %s16 = int_to_ptr.hbm [resolvable:$true] %s15
      %s17 = sshll.u32 [#allocation2], 4
      %s18 = int_to_ptr.vmem [resolvable:$true] %s17
      %23 = dma.hbm_to_vmem [thread:$0]  %s16, 512, %s18, [#allocation3], 64, 64, 4
    $region5: #{tpu_custom_call.1} parent=1 // pred_fallthru
      _
    // Predicated region
    $region6: #{tpu_custom_call.1} parent=1 // pred_check
      _
    $region7: #{tpu_custom_call.1} parent=1 // pred_check_branch
      %25 = sbr.rel (0) target = $region9
    $region8: #{tpu_custom_call.1} parent=1 // pred_region
      %27 = vsyncadd [#allocation6], 0
      %s28 = sshll.u32 %s1, 4
      %s29 = int_to_ptr.hbm [resolvable:$true] %s28
      %s30 = sshll.u32 [#allocation5], 4
      %s31 = int_to_ptr.vmem [resolvable:$true] %s30
      %36 = dma.hbm_to_vmem [thread:$0]  %s29, 512, %s31, [#allocation6], 64, 64, 4
    $region9: #{tpu_custom_call.1} parent=1 // pred_fallthru
      _
    // Predicated region
    $region10: #{tpu_custom_call.1} parent=1 // pred_check
      _
    $region11: #{tpu_custom_call.1} parent=1 // pred_check_branch
      %38 = sbr.rel (0) target = $region13
    $region12: #{tpu_custom_call.1} parent=1 // pred_region
      _
    $region13: #{tpu_custom_call.1} parent=1 // pred_fallthru
      _
    // Predicated region
    $region14: #{tpu_custom_call.1} parent=1 // pred_check
      _
    $region15: #{tpu_custom_call.1} parent=1 // pred_check_branch
      %40 = sbr.rel (0) target = $region17
    $region16: #{tpu_custom_call.1} parent=1 // pred_region
      %42 = dma.done [#allocation3], 512
    $region17: #{tpu_custom_call.1} parent=1 // pred_fallthru
      _
    // Predicated region
    $region18: #{tpu_custom_call.1} parent=1 // pred_check
      _
    $region19: #{tpu_custom_call.1} parent=1 // pred_check_branch
      %44 = sbr.rel (0) target = $region21
    $region20: #{tpu_custom_call.1} parent=1 // pred_region
      %46 = dma.done [#allocation6], 512
    $region21: #{tpu_custom_call.1} parent=1 // pred_fallthru
      _
    %v47 = vld [vmem:[#allocation2] sm:$0xf]
    %v48 = vld [vmem:[#allocation2 + $0x4] sm:$0xf]
    %v49 = vld [vmem:[#allocation2 + $0x8] sm:$0xf]
    %v50 = vld [vmem:[#allocation2 + $0xc] sm:$0xf]
    %v51 = vld [vmem:[#allocation2 + $0x10] sm:$0xf]
    %v52 = vld [vmem:[#allocation2 + $0x14] sm:$0xf]
    %v53 = vld [vmem:[#allocation2 + $0x18] sm:$0xf]
    %v54 = vld [vmem:[#allocation2 + $0x1c] sm:$0xf]
    %v55 = vld [vmem:[#allocation5] sm:$0xf]
    %v56 = vld [vmem:[#allocation5 + $0x4] sm:$0xf]
    %v57 = vld [vmem:[#allocation5 + $0x8] sm:$0xf]
    %v58 = vld [vmem:[#allocation5 + $0xc] sm:$0xf]
    %v59 = vld [vmem:[#allocation5 + $0x10] sm:$0xf]
    %v60 = vld [vmem:[#allocation5 + $0x14] sm:$0xf]
    %v61 = vld [vmem:[#allocation5 + $0x18] sm:$0xf]
    %v62 = vld [vmem:[#allocation5 + $0x1c] sm:$0xf]
    %v63 = vmul.f32 %v47, %v55
    %v64 = vmul.f32 %v48, %v56
    %v65 = vmul.f32 %v49, %v57
    %v66 = vmul.f32 %v50, %v58
    %v67 = vmul.f32 %v51, %v59
    %v68 = vmul.f32 %v52, %v60
    %v69 = vmul.f32 %v53, %v61
    %v70 = vmul.f32 %v54, %v62
    %vm71 = vcmask 257024
    %v72 = vsel %vm71, %v63, 0.0
    %v73 = vsel %vm71, %v64, 0.0
    %v74 = vadd.f32 %v72, %v73
    %v75 = vsel %vm71, %v65, 0.0
    %v76 = vadd.f32 %v74, %v75
    %v77 = vsel %vm71, %v66, 0.0
    %v78 = vadd.f32 %v76, %v77
    %v79 = vsel %vm71, %v67, 0.0
    %v80 = vadd.f32 %v78, %v79
    %v81 = vsel %vm71, %v68, 0.0
    %v82 = vadd.f32 %v80, %v81
    %v83 = vsel %vm71, %v69, 0.0
    %v84 = vadd.f32 %v82, %v83
    %v85 = vsel %vm71, %v70, 0.0
    %v86 = vadd.f32 %v84, %v85
    %v87 = vsel %vm71, %v86, 0.0
    %88 = vadd.xlane.f32.xlu0 %v87
    %v89 = vpop.xlane.xlu0 %88
    %v90 = vld [vmem:[%s2] sm:$0x1]
    %v92 = vperm.slane %v90, 0
    %v93 = vlaneseq
    %v94 = vshrl.u32 %v93, 7
    %96 = vset.pattern.permute.xlu0 %v94
    %97 = vperm.xlu0 %96, %v92
    %v98 = vpop.permute.xlu0 %97
    %v100 = vadd.f32 %v89, %v98
    %vm101 = vcmp.ge.f32.partialorder %v100, 0.0
    %v102 = vmul.f32 %v100, 0.2
    %v103 = vsel %vm101, %v100, %v102
    %105 = vset.pattern.permute.xlu0 0
    %106 = vperm.xlu0 %105, %v103
    %v107 = vpop.permute.xlu0 %106
    %v108 = vlaneseq
    %v109 = vand.u32 %v108, 127
    %v110 = vperm.slane %v107, %v109
    %vm112 = vcmask 24576
    %113 = vst.msk [vmem:[#allocation7] sm:$0x1] %vm112, %v110
    // Predicated region
    $region22: #{tpu_custom_call.1} parent=1 // pred_check
      _
    $region23: #{tpu_custom_call.1} parent=1 // pred_check_branch
      %115 = sbr.rel (0) target = $region25
    $region24: #{tpu_custom_call.1} parent=1 // pred_region
      %117 = vsyncadd [#allocation4], 0
      %s119 = sshll.u32 [#allocation7], 4
      %s120 = int_to_ptr.vmem [resolvable:$true] %s119
      %s121 = sshll.u32 %s3, 4
      %s122 = int_to_ptr.hbm [resolvable:$true] %s121
      %124 = dma.vmem_to_hbm [thread:$0]  %s120, 16, %s122, [#allocation4]
    $region25: #{tpu_custom_call.1} parent=1 // pred_fallthru
      _
    // Predicated region
    $region26: #{tpu_custom_call.1} parent=1 // pred_check
      _
    $region27: #{tpu_custom_call.1} parent=1 // pred_check_branch
      %126 = sbr.rel (0) target = $region29
    $region28: #{tpu_custom_call.1} parent=1 // pred_region
      %128 = dma.done [#allocation4], 16
    $region29: #{tpu_custom_call.1} parent=1 // pred_fallthru
      _
    %129 = vsyncpa [#allocation3], 1
    %130 = vsyncpa [#allocation6], 1
    %131 = vsyncpa [#allocation4], 1

</llo_original>
